<compile_context>
chip_gen: v6e
topology: v6e:2x2x1
jax: 0.10.0
libtpu: 0.0.40
codegen_flags: <defaults>
</compile_context>

<pallas_src>
import functools

import jax
import jax.numpy as jnp
from jax.experimental import pallas as pl
from jax.experimental.pallas import tpu as pltpu


def _basic_block_kernel(downsample, H, *refs):
    """Fused BasicBlock forward for one batch element (lane dim = W*C)."""
    if downsample:
        (x_ref, w1_ref, b1_ref, w2_ref, b2_ref, wd_ref, bd_ref,
         out_ref, xp_ref, midp_ref) = refs
    else:
        (x_ref, w1_ref, b1_ref, w2_ref, b2_ref,
         out_ref, xp_ref, midp_ref) = refs

    wcin = xp_ref.shape[-1]    # W * Cin
    wpl = out_ref.shape[-1]    # W * planes

    # Zero only the 1-row H-halo of the scratch buffers (interiors are fully
    # overwritten below).  Done every step so this stays correct if the batch
    # axis is sharded across TensorCores ("parallel" semantics).
    zx = jnp.zeros((1, wcin), jnp.float32)
    zm = jnp.zeros((1, wpl), jnp.float32)
    xp_ref[0:1, :] = zx
    xp_ref[H + 1:H + 2, :] = zx
    midp_ref[0:1, :] = zm
    midp_ref[H + 1:H + 2, :] = zm

    # Stage the input into the H-padded scratch (W padding is encoded in the
    # banded weight matrices, so no W halo is needed).
    x = x_ref[0].astype(jnp.float32)               # (H, W*Cin)
    xp_ref[1:1 + H, :] = x

    # ---------------- conv1 (+BN1 scale folded) + bias + ReLU ----------------
    acc1 = jnp.zeros((H, wpl), jnp.float32)
    for kh in range(3):
        acc1 = acc1 + jnp.dot(xp_ref[kh:kh + H, :], w1_ref[kh],
                              preferred_element_type=jnp.float32)
    midp_ref[1:1 + H, :] = jnp.maximum(acc1 + b1_ref[0], 0.0)

    # ---------------- conv2 (+BN2 scale folded) + bias -----------------------
    acc2 = jnp.zeros((H, wpl), jnp.float32)
    for kh in range(3):
        acc2 = acc2 + jnp.dot(midp_ref[kh:kh + H, :], w2_ref[kh],
                              preferred_element_type=jnp.float32)
    y2 = acc2 + b2_ref[0]

    # ---------------- identity path ------------------------------------------
    if downsample:
        ident = jnp.dot(x, wd_ref[...],
                        preferred_element_type=jnp.float32) + bd_ref[0]
    else:
        ident = x   # requires Cin == planes (PyTorch semantics)

    out_ref[0] = jnp.maximum(y2 + ident, 0.0).astype(out_ref.dtype)


# --------------------- host-side weight re-layout (tiny) ---------------------

def _band_weights(w, scale, W):
    """(3,3,Cin,Cout) HWIO conv weight -> (3, W*Cin, W*Cout) banded matmul
    weights (kw taps + W zero-padding encoded), BN scale folded in."""
    wf = (w * scale).astype(jnp.float32)           # fold BN scale per out-ch
    _, _, cin, cout = w.shape
    wi = jnp.arange(W)[:, None]
    wo = jnp.arange(W)[None, :]
    out = jnp.zeros((3, W, cin, W, cout), jnp.float32)
    for kw in range(3):
        mask = (wi == wo + kw - 1).astype(jnp.float32)       # (W, W) band
        out = out + jnp.einsum("io,kcp->kicop", mask, wf[:, kw])
    return out.reshape(3, W * cin, W * cout)


def _blockdiag_weight(wd, scale, W):
    """(Cin,Cout) 1x1 conv weight -> (W*Cin, W*Cout) block-diagonal matrix."""
    wdf = (wd * scale).astype(jnp.float32)
    eye = jnp.eye(W, dtype=jnp.float32)
    cin, cout = wd.shape
    return jnp.einsum("io,cp->icop", eye, wdf).reshape(W * cin, W * cout)


def basic_block_forward(x, params, *, downsample=False):
    """x: (B, H, W, Cin) float32, NHWC."""
    B, H, W, cin = x.shape
    planes = params["w1"].shape[-1]
    wpl = W * planes

    w1b = _band_weights(params["w1"], params["s1"], W)
    w2b = _band_weights(params["w2"], params["s2"], W)
    b1t = jnp.tile(params["b1"], W).reshape(1, wpl)
    b2t = jnp.tile(params["b2"], W).reshape(1, wpl)

    x_flat = x.reshape(B, H, W * cin)              # lane dim = W*Cin

    in_arrays = [x_flat, w1b, b1t, w2b, b2t]
    in_specs = [
        pl.BlockSpec((1, H, W * cin), lambda b: (b, 0, 0)),
        pl.BlockSpec((3, W * cin, wpl), lambda b: (0, 0, 0)),
        pl.BlockSpec((1, wpl), lambda b: (0, 0)),
        pl.BlockSpec((3, wpl, wpl), lambda b: (0, 0, 0)),
        pl.BlockSpec((1, wpl), lambda b: (0, 0)),
    ]
    if downsample:
        wdb = _blockdiag_weight(params["wd"], params["sd"], W)
        bdt = jnp.tile(params["bd"], W).reshape(1, wpl)
        in_arrays += [wdb, bdt]
        in_specs += [
            pl.BlockSpec((W * cin, wpl), lambda b: (0, 0)),
            pl.BlockSpec((1, wpl), lambda b: (0, 0)),
        ]

    kernel = functools.partial(_basic_block_kernel, downsample, H)

    out_flat = pl.pallas_call(
        kernel,
        out_shape=jax.ShapeDtypeStruct((B, H, wpl), x.dtype),
        grid_spec=pltpu.PrefetchScalarGridSpec(
            num_scalar_prefetch=0,
            grid=(B,),
            in_specs=in_specs,
            out_specs=pl.BlockSpec((1, H, wpl), lambda b: (b, 0, 0)),
            scratch_shapes=[pltpu.VMEM((H + 2, W * cin), jnp.float32),
                            pltpu.VMEM((H + 2, wpl), jnp.float32)],
        ),
        compiler_params=pltpu.CompilerParams(
            dimension_semantics=("parallel",),      # batch is independent
            vmem_limit_bytes=32 * 1024 * 1024,      # well above working set
        ),
    )(*in_arrays)
    return out_flat.reshape(B, H, W, planes)


# ----------------------------- parameter setup -----------------------------

def _conv_init(key, shape, fan_in):
    bound = 1.0 / jnp.sqrt(jnp.float32(fan_in))
    return jax.random.uniform(key, shape, jnp.float32, -bound, bound)


def _bn_fold(keys, c, eps=1e-3):
    gamma = 1.0 + 0.1 * jax.random.normal(keys[0], (c,), jnp.float32)
    beta = 0.1 * jax.random.normal(keys[1], (c,), jnp.float32)
    mean = 0.1 * jax.random.normal(keys[2], (c,), jnp.float32)
    var = jnp.abs(jax.random.normal(keys[3], (c,), jnp.float32)) + 0.5
    scale = gamma / jnp.sqrt(var + eps)
    bias = beta - mean * scale
    return scale, bias


def init_params(key, inplanes, planes, downsample):
    keys = jax.random.split(key, 16)
    w1 = _conv_init(keys[0], (3, 3, inplanes, planes), 9 * inplanes)
    w2 = _conv_init(keys[1], (3, 3, planes, planes), 9 * planes)
    s1, b1 = _bn_fold(keys[2:6], planes)
    s2, b2 = _bn_fold(keys[6:10], planes)
    p = dict(w1=w1, s1=s1, b1=b1, w2=w2, s2=s2, b2=b2)
    if downsample:
        p["wd"] = _conv_init(keys[10], (inplanes, planes), inplanes)
        p["sd"], p["bd"] = _bn_fold(keys[11:15], planes)
    return p


# ----------------------------- pure-JAX reference -----------------------------

def reference(x, p, downsample):
    out = jax.lax.conv_general_dilated(
        x, p["w1"], (1, 1), ((1, 1), (1, 1)),
        dimension_numbers=("NHWC", "HWIO", "NHWC"))
    out = jnp.maximum(out * p["s1"] + p["b1"], 0.0)
    out = jax.lax.conv_general_dilated(
        out, p["w2"], (1, 1), ((1, 1), (1, 1)),
        dimension_numbers=("NHWC", "HWIO", "NHWC"))
    out = out * p["s2"] + p["b2"]
    if downsample:
        ident = jnp.einsum("bhwc,cp->bhwp", x, p["wd"]) * p["sd"] + p["bd"]
    else:
        ident = x
    return jnp.maximum(out + ident, 0.0)


if __name__ == "__main__":
    key = jax.random.PRNGKey(0)
    kx, kp1, kp2 = jax.random.split(key, 3)

    B, H, W = 2, 16, 16

    # Case 1: default BasicBlock(inplanes=4, planes=4), no downsample.
    cin = planes = 4
    x = jax.random.normal(kx, (B, H, W, cin), jnp.float32)
    params = init_params(kp1, cin, planes, downsample=False)
    out = basic_block_forward(x, params, downsample=False)
    out = jax.block_until_ready(out)
    ref = reference(x, params, downsample=False)
    assert out.shape == (B, H, W, planes)
    assert jnp.allclose(out, ref, atol=2e-4, rtol=2e-4), (
        "mismatch (no downsample): "
        f"max abs err {float(jnp.max(jnp.abs(out - ref)))}")

    # Case 2: BasicBlock(inplanes=4, planes=8, downsample=True), stride=1.
    cin2, planes2 = 4, 8
    params2 = init_params(kp2, cin2, planes2, downsample=True)
    out2 = basic_block_forward(x, params2, downsample=True)
    out2 = jax.block_until_ready(out2)
    ref2 = reference(x, params2, downsample=True)
    assert out2.shape == (B, H, W, planes2)
    assert jnp.allclose(out2, ref2, atol=2e-4, rtol=2e-4), (
        "mismatch (downsample): "
        f"max abs err {float(jnp.max(jnp.abs(out2 - ref2)))}")

    print("KERNEL_OK")
</pallas_src>

<mosaic_0001>
module attributes {stable_mosaic.version = 11 : i64} {
  func.func @_basic_block_kernel(%arg0: i32, %arg1: memref<1x16x64xf32, #tpu.memory_space<vmem>>, %arg2: memref<3x64x64xf32, #tpu.memory_space<vmem>>, %arg3: memref<1x64xf32, #tpu.memory_space<vmem>>, %arg4: memref<3x64x64xf32, #tpu.memory_space<vmem>>, %arg5: memref<1x64xf32, #tpu.memory_space<vmem>>, %arg6: memref<1x16x64xf32, #tpu.memory_space<vmem>>, %arg7: memref<18x64xf32, #tpu.memory_space<vmem>>, %arg8: memref<18x64xf32, #tpu.memory_space<vmem>>) attributes {dimension_semantics = [#tpu.dimension_semantics<parallel>], iteration_bounds = array<i64: 2>, scalar_prefetch = 0 : i64, scratch_operands = 2 : i64, tpu.core_type = #tpu.core_type<tc>, window_params = [{transform_indices = @transform_0, window_bounds = array<i64: 1, 16, 64>}, {pipeline_mode = #tpu.pipeline_mode<synchronous>, transform_indices = @transform_1, window_bounds = array<i64: 3, 64, 64>}, {pipeline_mode = #tpu.pipeline_mode<synchronous>, transform_indices = @transform_2, window_bounds = array<i64: 1, 64>}, {pipeline_mode = #tpu.pipeline_mode<synchronous>, transform_indices = @transform_3, window_bounds = array<i64: 3, 64, 64>}, {pipeline_mode = #tpu.pipeline_mode<synchronous>, transform_indices = @transform_4, window_bounds = array<i64: 1, 64>}, {transform_indices = @transform_5, window_bounds = array<i64: 1, 16, 64>}]} {
    %cst = arith.constant 0.000000e+00 : f32
    %0 = vector.broadcast %cst : f32 to vector<1x64xf32>
    %cst_0 = arith.constant 0.000000e+00 : f32
    %1 = vector.broadcast %cst_0 : f32 to vector<1x64xf32>
    %c0 = arith.constant 0 : index
    %c0_1 = arith.constant 0 : index
    %2 = vector.load %arg7[%c0, %c0_1] : memref<18x64xf32, #tpu.memory_space<vmem>>, vector<1x64xf32>
    tpu.vector_store %arg7[%c0, %c0_1], %0 {strides = array<i32>} : memref<18x64xf32, #tpu.memory_space<vmem>>, vector<1x64xf32>,
    %c17 = arith.constant 17 : index
    %c0_2 = arith.constant 0 : index
    %3 = vector.load %arg7[%c17, %c0_2] : memref<18x64xf32, #tpu.memory_space<vmem>>, vector<1x64xf32>
    tpu.vector_store %arg7[%c17, %c0_2], %0 {strides = array<i32>} : memref<18x64xf32, #tpu.memory_space<vmem>>, vector<1x64xf32>,
    %c0_3 = arith.constant 0 : index
    %c0_4 = arith.constant 0 : index
    %4 = vector.load %arg8[%c0_3, %c0_4] : memref<18x64xf32, #tpu.memory_space<vmem>>, vector<1x64xf32>
    tpu.vector_store %arg8[%c0_3, %c0_4], %1 {strides = array<i32>} : memref<18x64xf32, #tpu.memory_space<vmem>>, vector<1x64xf32>,
    %c17_5 = arith.constant 17 : index
    %c0_6 = arith.constant 0 : index
    %5 = vector.load %arg8[%c17_5, %c0_6] : memref<18x64xf32, #tpu.memory_space<vmem>>, vector<1x64xf32>
    tpu.vector_store %arg8[%c17_5, %c0_6], %1 {strides = array<i32>} : memref<18x64xf32, #tpu.memory_space<vmem>>, vector<1x64xf32>,
    %c0_7 = arith.constant 0 : index
    %c0_8 = arith.constant 0 : index
    %c0_9 = arith.constant 0 : index
    %6 = vector.load %arg1[%c0_7, %c0_8, %c0_9] : memref<1x16x64xf32, #tpu.memory_space<vmem>>, vector<1x16x64xf32>
    %7 = vector.shape_cast %6 : vector<1x16x64xf32> to vector<16x64xf32>
    %c1 = arith.constant 1 : index
    %c0_10 = arith.constant 0 : index
    %8 = vector.load %arg7[%c1, %c0_10] : memref<18x64xf32, #tpu.memory_space<vmem>>, vector<16x64xf32>
    tpu.vector_store %arg7[%c1, %c0_10], %7 {strides = array<i32>} : memref<18x64xf32, #tpu.memory_space<vmem>>, vector<16x64xf32>,
    %cst_11 = arith.constant 0.000000e+00 : f32
    %9 = vector.broadcast %cst_11 : f32 to vector<16x64xf32>
    %c0_12 = arith.constant 0 : index
    %c0_13 = arith.constant 0 : index
    %10 = vector.load %arg7[%c0_12, %c0_13] : memref<18x64xf32, #tpu.memory_space<vmem>>, vector<16x64xf32>
    %c0_14 = arith.constant 0 : index
    %c0_15 = arith.constant 0 : index
    %c0_16 = arith.constant 0 : index
    %11 = vector.load %arg2[%c0_14, %c0_15, %c0_16] : memref<3x64x64xf32, #tpu.memory_space<vmem>>, vector<1x64x64xf32>
    %12 = vector.shape_cast %11 : vector<1x64x64xf32> to vector<64x64xf32>
    %cst_17 = arith.constant dense<0.000000e+00> : vector<16x64xf32>
    %13 = tpu.matmul %10, %12, %cst_17 {dimension_numbers = #tpu.dot_dimension_numbers<[1], [0], [0], [1], [0, 0, 1, 1], [], []>} : vector<16x64xf32>, vector<64x64xf32>, vector<16x64xf32> -> vector<16x64xf32>
    %14 = arith.addf %9, %13 : vector<16x64xf32>
    %c1_18 = arith.constant 1 : index
    %c0_19 = arith.constant 0 : index
    %15 = vector.load %arg7[%c1_18, %c0_19] : memref<18x64xf32, #tpu.memory_space<vmem>>, vector<16x64xf32>
    %c1_20 = arith.constant 1 : index
    %c0_21 = arith.constant 0 : index
    %c0_22 = arith.constant 0 : index
    %16 = vector.load %arg2[%c1_20, %c0_21, %c0_22] : memref<3x64x64xf32, #tpu.memory_space<vmem>>, vector<1x64x64xf32>
    %17 = vector.shape_cast %16 : vector<1x64x64xf32> to vector<64x64xf32>
    %cst_23 = arith.constant dense<0.000000e+00> : vector<16x64xf32>
    %18 = tpu.matmul %15, %17, %cst_23 {dimension_numbers = #tpu.dot_dimension_numbers<[1], [0], [0], [1], [0, 0, 1, 1], [], []>} : vector<16x64xf32>, vector<64x64xf32>, vector<16x64xf32> -> vector<16x64xf32>
    %19 = arith.addf %14, %18 : vector<16x64xf32>
    %c2 = arith.constant 2 : index
    %c0_24 = arith.constant 0 : index
    %20 = vector.load %arg7[%c2, %c0_24] : memref<18x64xf32, #tpu.memory_space<vmem>>, vector<16x64xf32>
    %c2_25 = arith.constant 2 : index
    %c0_26 = arith.constant 0 : index
    %c0_27 = arith.constant 0 : index
    %21 = vector.load %arg2[%c2_25, %c0_26, %c0_27] : memref<3x64x64xf32, #tpu.memory_space<vmem>>, vector<1x64x64xf32>
    %22 = vector.shape_cast %21 : vector<1x64x64xf32> to vector<64x64xf32>
    %cst_28 = arith.constant dense<0.000000e+00> : vector<16x64xf32>
    %23 = tpu.matmul %20, %22, %cst_28 {dimension_numbers = #tpu.dot_dimension_numbers<[1], [0], [0], [1], [0, 0, 1, 1], [], []>} : vector<16x64xf32>, vector<64x64xf32>, vector<16x64xf32> -> vector<16x64xf32>
    %24 = arith.addf %19, %23 : vector<16x64xf32>
    %c0_29 = arith.constant 0 : index
    %c0_30 = arith.constant 0 : index
    %25 = vector.load %arg3[%c0_29, %c0_30] : memref<1x64xf32, #tpu.memory_space<vmem>>, vector<1x64xf32>
    %26 = vector.shape_cast %25 : vector<1x64xf32> to vector<64xf32>
    %27 = vector.shape_cast %26 : vector<64xf32> to vector<1x64xf32>
    %28 = vector.broadcast %27 : vector<1x64xf32> to vector<16x64xf32>
    %29 = arith.addf %24, %28 : vector<16x64xf32>
    %cst_31 = arith.constant 0.000000e+00 : f32
    %30 = vector.broadcast %cst_31 : f32 to vector<16x64xf32>
    %31 = arith.maximumf %29, %30 : vector<16x64xf32>
    %c1_32 = arith.constant 1 : index
    %c0_33 = arith.constant 0 : index
    %32 = vector.load %arg8[%c1_32, %c0_33] : memref<18x64xf32, #tpu.memory_space<vmem>>, vector<16x64xf32>
    tpu.vector_store %arg8[%c1_32, %c0_33], %31 {strides = array<i32>} : memref<18x64xf32, #tpu.memory_space<vmem>>, vector<16x64xf32>,
    %cst_34 = arith.constant 0.000000e+00 : f32
    %33 = vector.broadcast %cst_34 : f32 to vector<16x64xf32>
    %c0_35 = arith.constant 0 : index
    %c0_36 = arith.constant 0 : index
    %34 = vector.load %arg8[%c0_35, %c0_36] : memref<18x64xf32, #tpu.memory_space<vmem>>, vector<16x64xf32>
    %c0_37 = arith.constant 0 : index
    %c0_38 = arith.constant 0 : index
    %c0_39 = arith.constant 0 : index
    %35 = vector.load %arg4[%c0_37, %c0_38, %c0_39] : memref<3x64x64xf32, #tpu.memory_space<vmem>>, vector<1x64x64xf32>
    %36 = vector.shape_cast %35 : vector<1x64x64xf32> to vector<64x64xf32>
    %cst_40 = arith.constant dense<0.000000e+00> : vector<16x64xf32>
    %37 = tpu.matmul %34, %36, %cst_40 {dimension_numbers = #tpu.dot_dimension_numbers<[1], [0], [0], [1], [0, 0, 1, 1], [], []>} : vector<16x64xf32>, vector<64x64xf32>, vector<16x64xf32> -> vector<16x64xf32>
    %38 = arith.addf %33, %37 : vector<16x64xf32>
    %c1_41 = arith.constant 1 : index
    %c0_42 = arith.constant 0 : index
    %39 = vector.load %arg8[%c1_41, %c0_42] : memref<18x64xf32, #tpu.memory_space<vmem>>, vector<16x64xf32>
    %c1_43 = arith.constant 1 : index
    %c0_44 = arith.constant 0 : index
    %c0_45 = arith.constant 0 : index
    %40 = vector.load %arg4[%c1_43, %c0_44, %c0_45] : memref<3x64x64xf32, #tpu.memory_space<vmem>>, vector<1x64x64xf32>
    %41 = vector.shape_cast %40 : vector<1x64x64xf32> to vector<64x64xf32>
    %cst_46 = arith.constant dense<0.000000e+00> : vector<16x64xf32>
    %42 = tpu.matmul %39, %41, %cst_46 {dimension_numbers = #tpu.dot_dimension_numbers<[1], [0], [0], [1], [0, 0, 1, 1], [], []>} : vector<16x64xf32>, vector<64x64xf32>, vector<16x64xf32> -> vector<16x64xf32>
    %43 = arith.addf %38, %42 : vector<16x64xf32>
    %c2_47 = arith.constant 2 : index
    %c0_48 = arith.constant 0 : index
    %44 = vector.load %arg8[%c2_47, %c0_48] : memref<18x64xf32, #tpu.memory_space<vmem>>, vector<16x64xf32>
    %c2_49 = arith.constant 2 : index
    %c0_50 = arith.constant 0 : index
    %c0_51 = arith.constant 0 : index
    %45 = vector.load %arg4[%c2_49, %c0_50, %c0_51] : memref<3x64x64xf32, #tpu.memory_space<vmem>>, vector<1x64x64xf32>
    %46 = vector.shape_cast %45 : vector<1x64x64xf32> to vector<64x64xf32>
    %cst_52 = arith.constant dense<0.000000e+00> : vector<16x64xf32>
    %47 = tpu.matmul %44, %46, %cst_52 {dimension_numbers = #tpu.dot_dimension_numbers<[1], [0], [0], [1], [0, 0, 1, 1], [], []>} : vector<16x64xf32>, vector<64x64xf32>, vector<16x64xf32> -> vector<16x64xf32>
    %48 = arith.addf %43, %47 : vector<16x64xf32>
    %c0_53 = arith.constant 0 : index
    %c0_54 = arith.constant 0 : index
    %49 = vector.load %arg5[%c0_53, %c0_54] : memref<1x64xf32, #tpu.memory_space<vmem>>, vector<1x64xf32>
    %50 = vector.shape_cast %49 : vector<1x64xf32> to vector<64xf32>
    %51 = vector.shape_cast %50 : vector<64xf32> to vector<1x64xf32>
    %52 = vector.broadcast %51 : vector<1x64xf32> to vector<16x64xf32>
    %53 = arith.addf %48, %52 : vector<16x64xf32>
    %54 = arith.addf %53, %7 : vector<16x64xf32>
    %cst_55 = arith.constant 0.000000e+00 : f32
    %55 = vector.broadcast %cst_55 : f32 to vector<16x64xf32>
    %56 = arith.maximumf %54, %55 : vector<16x64xf32>
    %c0_56 = arith.constant 0 : index
    %c0_57 = arith.constant 0 : index
    %c0_58 = arith.constant 0 : index
    %57 = vector.load %arg6[%c0_56, %c0_57, %c0_58] : memref<1x16x64xf32, #tpu.memory_space<vmem>>, vector<1x16x64xf32>
    %58 = vector.shape_cast %57 : vector<1x16x64xf32> to vector<16x64xf32>
    %59 = vector.shape_cast %56 : vector<16x64xf32> to vector<1x16x64xf32>
    tpu.vector_store %arg6[%c0_56, %c0_57, %c0_58], %59 {strides = array<i32>} : memref<1x16x64xf32, #tpu.memory_space<vmem>>, vector<1x16x64xf32>,
    return
  }
  func.func @transform_0(%arg0: i32) -> (i32, i32, i32) {
    %c0_i32 = arith.constant 0 : i32
    %c0_i32_0 = arith.constant 0 : i32
    %c0_i32_1 = arith.constant 0 : i32
    return %arg0, %c0_i32, %c0_i32_0 : i32, i32, i32
  }
  func.func @transform_1(%arg0: i32) -> (i32, i32, i32) {
    %c0_i32 = arith.constant 0 : i32
    %c0_i32_0 = arith.constant 0 : i32
    %c0_i32_1 = arith.constant 0 : i32
    %c0_i32_2 = arith.constant 0 : i32
    return %c0_i32, %c0_i32_0, %c0_i32_1 : i32, i32, i32
  }
  func.func @transform_2(%arg0: i32) -> (i32, i32) {
    %c0_i32 = arith.constant 0 : i32
    %c0_i32_0 = arith.constant 0 : i32
    %c0_i32_1 = arith.constant 0 : i32
    return %c0_i32, %c0_i32_0 : i32, i32
  }
  func.func @transform_3(%arg0: i32) -> (i32, i32, i32) {
    %c0_i32 = arith.constant 0 : i32
    %c0_i32_0 = arith.constant 0 : i32
    %c0_i32_1 = arith.constant 0 : i32
    %c0_i32_2 = arith.constant 0 : i32
    return %c0_i32, %c0_i32_0, %c0_i32_1 : i32, i32, i32
  }
  func.func @transform_4(%arg0: i32) -> (i32, i32) {
    %c0_i32 = arith.constant 0 : i32
    %c0_i32_0 = arith.constant 0 : i32
    %c0_i32_1 = arith.constant 0 : i32
    return %c0_i32, %c0_i32_0 : i32, i32
  }
  func.func @transform_5(%arg0: i32) -> (i32, i32, i32) {
    %c0_i32 = arith.constant 0 : i32
    %c0_i32_0 = arith.constant 0 : i32
    %c0_i32_1 = arith.constant 0 : i32
    return %arg0, %c0_i32, %c0_i32_0 : i32, i32, i32
  }
}

</mosaic_0001>

<llo_original>
// kernel: tpu_custom_call.1
$region0: #{tpu_custom_call.1}
  #allocation0 [shape = 'u32[]', space=smem, size = 0x4, offset = 0x4, fixed_abs, tag = 'smem constant byte address 0x4 - core index']
  #allocation1 [shape = 'u32[144,128]{1,0:T(1,128)}', space=vmem, size = 0x12000, scoped, tag = 'internal scratch']
  #allocation2 [shape = 'f32[18,64]{1,0:T(8,128)}', space=vmem, size = 0x3000, scoped, tag = 'scratch operand']
  #allocation3 [shape = 'f32[18,64]{1,0:T(8,128)}', space=vmem, size = 0x3000, scoped, tag = 'scratch operand']
  %s0 = inlined_call_operand.hbm [shape: f32[2,16,64], index: 0, kind: input, shape index: {}]
  %s1 = inlined_call_operand.hbm [shape: f32[3,64,64], index: 1, kind: input, shape index: {}]
  %s2 = inlined_call_operand.vmem [shape: f32[1,64], index: 2, kind: input, shape index: {}]
  %s3 = inlined_call_operand.hbm [shape: f32[3,64,64], index: 3, kind: input, shape index: {}]
  %s4 = inlined_call_operand.vmem [shape: f32[1,64], index: 4, kind: input, shape index: {}]
  %s5 = inlined_call_operand.hbm [shape: f32[2,16,64], index: 5, kind: output, shape index: {}]
  %s6 = sld [smem:[#allocation0]]
  $region65: #{tpu_custom_call.1} parent=0
    _
  %s8 = ssub.s32 1, %s6
  %s9 = scalar_select 0, %s8, %s6
  $region1: #{tpu_custom_call.1} parent=0
    #allocation4 [shape = 'u8[16384]{0}', space=vmem, size = 0x4000, scoped, tag = 'input window, operand 0']
    #allocation5 [shape = 's32[2]{0}', space=sflag, size = 0x8, scoped, tag = 'scoped memory for tpu_custom_call.1']
    #allocation6 [shape = 's32[2]{0}', space=sflag, size = 0x8, scoped, tag = 'scoped memory for tpu_custom_call.1']
    #allocation7 [shape = 'u8[98304]{0}', space=vmem, size = 0x18000, scoped, tag = 'input window, operand 1, single buffered']
    #allocation8 [shape = 's32[1]{0}', space=sflag, size = 0x4, scoped, tag = 'scoped memory for tpu_custom_call.1']
    #allocation9 [shape = 'u8[98304]{0}', space=vmem, size = 0x18000, scoped, tag = 'input window, operand 3, single buffered']
    #allocation10 [shape = 'u8[16384]{0}', space=vmem, size = 0x4000, scoped, tag = 'output window, operand 0']
    %10 = vsyncpa [#allocation5], 0
    %s11 = scalar_lea.sflag [#allocation5], 1
    %12 = vsyncpa %s11, 0
    %13 = vsyncpa [#allocation8], 0
    %14 = vsyncpa [#allocation6], 0
    %s15 = scalar_lea.sflag [#allocation6], 1
    %16 = vsyncpa %s15, 0
    loop: start=0, step=1, limit=4
    $region2: #{tpu_custom_call.1} parent=1 // loop_pre_header
      _
    $region3: #{tpu_custom_call.1} parent=1 // loop_header
      %s18 = sphi 0, %s22
      %p19 = scmp.ge.s32.totalorder %s18, 4
      %s28 = sphi 0, %s30
      %s31 = sphi 0, %s28
      %s32 = sphi 0, %s31
      %s48 = sphi 0, %s32
      %s52 = sphi 0, %s52
      %s54 = sphi 0, %s52
      %s55 = sphi 0, %s54
      %s69 = sphi 0, %s55
      %s73 = sphi 0, %s73
      %s75 = sphi 0, %s73
      %s76 = sphi 0, %s75
      %s90 = sphi 0, %s76
      %s94 = sphi 0, %s94
      %s96 = sphi 0, %s94
      %s97 = sphi 0, %s96
      %s111 = sphi 0, %s97
      %s115 = sphi 0, %s115
      %s117 = sphi 0, %s115
      %s118 = sphi 0, %s117
      %s132 = sphi 0, %s118
      %s138 = sphi 0, %s140
      %s141 = sphi 0, %s138
      %s142 = sphi 0, %s141
      %s158 = sphi 0, %s142
    $region4: #{tpu_custom_call.1} parent=1 // loop_header_branch
      %21 = sbr.rel (%p19) target = $region8
    $region5: #{tpu_custom_call.1} parent=1 // loop_body
      %s23 = ssub.s32 %s18, 1
      %s24 = ssub.s32 %s18, 2
      %s25 = sadd.s32 %s18, 1
      %s26 = ssub.s32 %s18, %s25
      %p27 = scmp.eq.s32.totalorder %s26, 0
      %s29 = sadd.s32 %s28, 1
      %s30 = scalar_select %p27, %s28, %s29
      %p33 = pneg %p27
      %p34 = scmp.eq.s32.totalorder %s18, 1
      %p35 = por %p33, %p34
      %p36 = scmp.ne.s32.totalorder %s28, %s31
      %p37 = scmp.eq.s32.totalorder %s18, 0
      %p38 = por %p36, %p37
      %p39 = scmp.ne.s32.totalorder %s28, %s31
      %p40 = scmp.eq.s32.totalorder %s23, 1
      %p41 = por %p39, %p40
      %p42 = scmp.ne.s32.totalorder %s31, %s32
      %p43 = scmp.eq.s32.totalorder %s23, 0
      %p44 = por %p42, %p43
      %p45 = scmp.ne.s32.totalorder %s31, %s32
      %p46 = scmp.eq.s32.totalorder %s24, 1
      %p47 = por %p45, %p46
      %p49 = scmp.ne.s32.totalorder %s32, %s48
      %p50 = scmp.eq.s32.totalorder %s24, 0
      %p51 = por %p49, %p50
      %s53 = sadd.s32 %s52, 1
      %p56 = scmp.eq.s32.totalorder %s18, 1
      %p57 = scmp.ne.s32.totalorder %s52, %s54
      %p58 = scmp.eq.s32.totalorder %s18, 0
      %p59 = por %p57, %p58
      %p60 = scmp.ne.s32.totalorder %s52, %s54
      %p61 = scmp.eq.s32.totalorder %s23, 1
      %p62 = por %p60, %p61
      %p63 = scmp.ne.s32.totalorder %s54, %s55
      %p64 = scmp.eq.s32.totalorder %s23, 0
      %p65 = por %p63, %p64
      %p66 = scmp.ne.s32.totalorder %s54, %s55
      %p67 = scmp.eq.s32.totalorder %s24, 1
      %p68 = por %p66, %p67
      %p70 = scmp.ne.s32.totalorder %s55, %s69
      %p71 = scmp.eq.s32.totalorder %s24, 0
      %p72 = por %p70, %p71
      %s74 = sadd.s32 %s73, 1
      %p77 = scmp.eq.s32.totalorder %s18, 1
      %p78 = scmp.ne.s32.totalorder %s73, %s75
      %p79 = scmp.eq.s32.totalorder %s18, 0
      %p80 = por %p78, %p79
      %p81 = scmp.ne.s32.totalorder %s73, %s75
      %p82 = scmp.eq.s32.totalorder %s23, 1
      %p83 = por %p81, %p82
      %p84 = scmp.ne.s32.totalorder %s75, %s76
      %p85 = scmp.eq.s32.totalorder %s23, 0
      %p86 = por %p84, %p85
      %p87 = scmp.ne.s32.totalorder %s75, %s76
      %p88 = scmp.eq.s32.totalorder %s24, 1
      %p89 = por %p87, %p88
      %p91 = scmp.ne.s32.totalorder %s76, %s90
      %p92 = scmp.eq.s32.totalorder %s24, 0
      %p93 = por %p91, %p92
      %s95 = sadd.s32 %s94, 1
      %p98 = scmp.eq.s32.totalorder %s18, 1
      %p99 = scmp.ne.s32.totalorder %s94, %s96
      %p100 = scmp.eq.s32.totalorder %s18, 0
      %p101 = por %p99, %p100
      %p102 = scmp.ne.s32.totalorder %s94, %s96
      %p103 = scmp.eq.s32.totalorder %s23, 1
      %p104 = por %p102, %p103
      %p105 = scmp.ne.s32.totalorder %s96, %s97
      %p106 = scmp.eq.s32.totalorder %s23, 0
      %p107 = por %p105, %p106
      %p108 = scmp.ne.s32.totalorder %s96, %s97
      %p109 = scmp.eq.s32.totalorder %s24, 1
      %p110 = por %p108, %p109
      %p112 = scmp.ne.s32.totalorder %s97, %s111
      %p113 = scmp.eq.s32.totalorder %s24, 0
      %p114 = por %p112, %p113
      %s116 = sadd.s32 %s115, 1
      %p119 = scmp.eq.s32.totalorder %s18, 1
      %p120 = scmp.ne.s32.totalorder %s115, %s117
      %p121 = scmp.eq.s32.totalorder %s18, 0
      %p122 = por %p120, %p121
      %p123 = scmp.ne.s32.totalorder %s115, %s117
      %p124 = scmp.eq.s32.totalorder %s23, 1
      %p125 = por %p123, %p124
      %p126 = scmp.ne.s32.totalorder %s117, %s118
      %p127 = scmp.eq.s32.totalorder %s23, 0
      %p128 = por %p126, %p127
      %p129 = scmp.ne.s32.totalorder %s117, %s118
      %p130 = scmp.eq.s32.totalorder %s24, 1
      %p131 = por %p129, %p130
      %p133 = scmp.ne.s32.totalorder %s118, %s132
      %p134 = scmp.eq.s32.totalorder %s24, 0
      %p135 = por %p133, %p134
      %s136 = ssub.s32 %s18, %s25
      %p137 = scmp.eq.s32.totalorder %s136, 0
      %s139 = sadd.s32 %s138, 1
      %s140 = scalar_select %p137, %s138, %s139
      %p143 = pneg %p137
      %p144 = scmp.eq.s32.totalorder %s18, 1
      %p145 = por %p143, %p144
      %p146 = scmp.ne.s32.totalorder %s138, %s141
      %p147 = scmp.eq.s32.totalorder %s18, 0
      %p148 = por %p146, %p147
      %p149 = scmp.ne.s32.totalorder %s138, %s141
      %p150 = scmp.eq.s32.totalorder %s23, 1
      %p151 = por %p149, %p150
      %p152 = scmp.ne.s32.totalorder %s141, %s142
      %p153 = scmp.eq.s32.totalorder %s23, 0
      %p154 = por %p152, %p153
      %p155 = scmp.ne.s32.totalorder %s141, %s142
      %p156 = scmp.eq.s32.totalorder %s24, 1
      %p157 = por %p155, %p156
      %p159 = scmp.ne.s32.totalorder %s142, %s158
      %p160 = scmp.eq.s32.totalorder %s24, 0
      %p161 = por %p159, %p160
      %p162 = scmp.le.s32.totalorder 1, %s18
      %p163 = scmp.lt.s32.totalorder %s18, 3
      %p164 = pnand %p162, %p163
      %p165 = pneg %p164
      // Predicated region
      $region9: #{tpu_custom_call.1} parent=5 // pred_check
        _
      $region10: #{tpu_custom_call.1} parent=5 // pred_check_branch
        %167 = sbr.rel (%p164) target = $region12
      $region11: #{tpu_custom_call.1} parent=5 // pred_region
        %s168 = ssub.s32 %s18, 1
        // Predicated region
        $region13: #{tpu_custom_call.1} parent=11 // pred_check
          %p169 = pneg %p65
        $region14: #{tpu_custom_call.1} parent=11 // pred_check_branch
          %171 = sbr.rel (%p169) target = $region16
        $region15: #{tpu_custom_call.1} parent=11 // pred_region
          %s173 = ssub.s32 3072, 3072
          %174 = vsyncadd [#allocation8], %s173
          %s175 = sshll.u32 [#allocation7], 4
          %s176 = int_to_ptr.vmem [resolvable:$true] %s175
          %181 = dma.hbm_to_vmem [thread:$0]  %s1, 3072, %s176, [#allocation8], 128, 128, 8
        $region16: #{tpu_custom_call.1} parent=11 // pred_fallthru
          _
        // Predicated region
        $region17: #{tpu_custom_call.1} parent=11 // pred_check
          %p182 = pneg %p86
        $region18: #{tpu_custom_call.1} parent=11 // pred_check_branch
          %184 = sbr.rel (%p182) target = $region20
        $region19: #{tpu_custom_call.1} parent=11 // pred_region
          _
        $region20: #{tpu_custom_call.1} parent=11 // pred_fallthru
          _
        // Predicated region
        $region21: #{tpu_custom_call.1} parent=11 // pred_check
          %p185 = pneg %p107
        $region22: #{tpu_custom_call.1} parent=11 // pred_check_branch
          %187 = sbr.rel (%p185) target = $region24
        $region23: #{tpu_custom_call.1} parent=11 // pred_region
          %s189 = ssub.s32 3072, 3072
          %190 = vsyncadd [#allocation8], %s189
          %s191 = sshll.u32 [#allocation9], 4
          %s192 = int_to_ptr.vmem [resolvable:$true] %s191
          %197 = dma.hbm_to_vmem [thread:$0]  %s3, 3072, %s192, [#allocation8], 128, 128, 8
        $region24: #{tpu_custom_call.1} parent=11 // pred_fallthru
          _
        // Predicated region
        $region25: #{tpu_custom_call.1} parent=11 // pred_check
          %p198 = pneg %p128
        $region26: #{tpu_custom_call.1} parent=11 // pred_check_branch
          %200 = sbr.rel (%p198) target = $region28
        $region27: #{tpu_custom_call.1} parent=11 // pred_region
          _
        $region28: #{tpu_custom_call.1} parent=11 // pred_fallthru
          _
      $region12: #{tpu_custom_call.1} parent=5 // pred_fallthru
        _
      %p201 = scmp.lt.s32.totalorder %s18, 2
      // Predicated region
      $region29: #{tpu_custom_call.1} parent=5 // pred_check
        %p202 = pneg %p201
      $region30: #{tpu_custom_call.1} parent=5 // pred_check_branch
        %204 = sbr.rel (%p202) target = $region32
      $region31: #{tpu_custom_call.1} parent=5 // pred_region
        // Predicated region
        $region33: #{tpu_custom_call.1} parent=31 // pred_check
          %p205 = pneg %p38
        $region34: #{tpu_custom_call.1} parent=31 // pred_check_branch
          %207 = sbr.rel (%p205) target = $region36
        $region35: #{tpu_custom_call.1} parent=31 // pred_region
          %s208 = sand.u32 %s28, 1
          %s209 = scalar_lea.sflag [#allocation5], %s208
          %s210 = sand.u32 %s28, 1
          %s211 = smul.addr %s210, 16
          %s212 = scalar_lea.vmem [#allocation4], %s211
          %s214 = ssub.s32 256, 256
          %215 = vsyncadd %s209, %s214
          %s216 = smul.addr %s18, 2
          %s217 = smul.addr %s216, 128
          %s218 = scalar_lea.hbm %s0, %s217
          %s219 = sshll.u32 %s212, 4
          %s220 = int_to_ptr.vmem [resolvable:$true] %s219
          %225 = dma.hbm_to_vmem [thread:$0]  %s218, 256, %s220, %s209, 128, 128, 8
        $region36: #{tpu_custom_call.1} parent=31 // pred_fallthru
          _
      $region32: #{tpu_custom_call.1} parent=5 // pred_fallthru
        _
      %p226 = scmp.le.s32.totalorder 1, %s18
      %p227 = scmp.lt.s32.totalorder %s18, 3
      %p228 = pnand %p226, %p227
      %p229 = pneg %p228
      // Predicated region
      $region37: #{tpu_custom_call.1} parent=5 // pred_check
        _
      $region38: #{tpu_custom_call.1} parent=5 // pred_check_branch
        %231 = sbr.rel (%p228) target = $region40
      $region39: #{tpu_custom_call.1} parent=5 // pred_region
        %s232 = ssub.s32 %s18, 1
        %s233 = sand.u32 %s31, 1
        %s234 = scalar_lea.sflag [#allocation5], %s233
        %s235 = sand.u32 %s31, 1
        %s236 = smul.addr %s235, 16
        %s237 = scalar_lea.vmem [#allocation4], %s236
        // Predicated region
        $region41: #{tpu_custom_call.1} parent=39 // pred_check
          %p238 = pneg %p44
        $region42: #{tpu_custom_call.1} parent=39 // pred_check_branch
          %240 = sbr.rel (%p238) target = $region44
        $region43: #{tpu_custom_call.1} parent=39 // pred_region
          %241 = dma.done %s234, 256
        $region44: #{tpu_custom_call.1} parent=39 // pred_fallthru
          _
        // Predicated region
        $region45: #{tpu_custom_call.1} parent=39 // pred_check
          %p242 = pneg %p65
        $region46: #{tpu_custom_call.1} parent=39 // pred_check_branch
          %244 = sbr.rel (%p242) target = $region48
        $region47: #{tpu_custom_call.1} parent=39 // pred_region
          %245 = dma.done [#allocation8], 3072
        $region48: #{tpu_custom_call.1} parent=39 // pred_fallthru
          _
        // Predicated region
        $region49: #{tpu_custom_call.1} parent=39 // pred_check
          %p246 = pneg %p107
        $region50: #{tpu_custom_call.1} parent=39 // pred_check_branch
          %248 = sbr.rel (%p246) target = $region52
        $region51: #{tpu_custom_call.1} parent=39 // pred_region
          %249 = dma.done [#allocation8], 3072
        $region52: #{tpu_custom_call.1} parent=39 // pred_fallthru
          _
        %s250 = sand.u32 %s31, 1
        %s251 = scalar_lea.sflag [#allocation5], %s250
        %s252 = sand.u32 %s31, 1
        %s253 = smul.addr %s252, 16
        %s254 = scalar_lea.vmem [#allocation4], %s253
        %p255 = pneg %p44
        %p256 = pneg %p41
        %p257 = pneg %p65
        %p258 = pneg %p62
        %p259 = pneg %p86
        %p260 = pneg %p83
        %p261 = pneg %p107
        %p262 = pneg %p104
        %p263 = pneg %p128
        %p264 = pneg %p125
        %p265 = pneg %p154
        %p266 = pneg %p151
        %s267 = sand.u32 %s141, 1
        %s268 = scalar_lea.sflag [#allocation6], %s267
        %s269 = sand.u32 %s141, 1
        %s270 = smul.addr %s269, 16
        %s271 = scalar_lea.vmem [#allocation10], %s270
        %vm272 = vcmask 516096
        %273 = vst.msk [vmem:[#allocation2] sm:$0x1] %vm272, 0.0
        %274 = vst.msk [vmem:[#allocation2 + $0x11] sm:$0x1] %vm272, 0.0
        %275 = vst.msk [vmem:[#allocation3] sm:$0x1] %vm272, 0.0
        %276 = vst.msk [vmem:[#allocation3 + $0x11] sm:$0x1] %vm272, 0.0
        %v277 = vld [vmem:[%s237] sm:$0xff]
        %v278 = vld [vmem:[%s237 + $0x8] sm:$0xff]
        %vm279 = vcmask 523264
        %280 = vst.msk [vmem:[#allocation2 + $0x1] sm:$0xff] %vm279, %v277
        %281 = vst.msk [vmem:[#allocation2 + $0x9] sm:$0xff] %vm279, %v278
        %v282 = vld [vmem:[#allocation2] sm:$0xff]
        %v283 = vld [vmem:[#allocation2 + $0x8] sm:$0xff]
        %v284 = vld [vmem:[#allocation7] sm:$0xff]
        %v285 = vld [vmem:[#allocation7 + $0x8] sm:$0xff]
        %v286 = vld [vmem:[#allocation7 + $0x10] sm:$0xff]
        %v287 = vld [vmem:[#allocation7 + $0x18] sm:$0xff]
        %v288 = vld [vmem:[#allocation7 + $0x20] sm:$0xff]
        %v289 = vld [vmem:[#allocation7 + $0x28] sm:$0xff]
        %v290 = vld [vmem:[#allocation7 + $0x30] sm:$0xff]
        %v291 = vld [vmem:[#allocation7 + $0x38] sm:$0xff]
        %v292 = vld [vmem:[#allocation2 + $0x1] sm:$0xff]
        %v293 = vld [vmem:[#allocation2 + $0x9] sm:$0xff]
        %s294 = scalar_lea.vmem [#allocation7], 64
        %v295 = vld [vmem:[%s294] sm:$0xff]
        %v296 = vld [vmem:[%s294 + $0x8] sm:$0xff]
        %v297 = vld [vmem:[%s294 + $0x10] sm:$0xff]
        %v298 = vld [vmem:[%s294 + $0x18] sm:$0xff]
        %v299 = vld [vmem:[%s294 + $0x20] sm:$0xff]
        %v300 = vld [vmem:[%s294 + $0x28] sm:$0xff]
        %v301 = vld [vmem:[%s294 + $0x30] sm:$0xff]
        %v302 = vld [vmem:[%s294 + $0x38] sm:$0xff]
        %v304 = vsel %vm279, %v292, 0
        %v307 = vsel %vm279, %v293, 0
        %309 = vmatprep.subr.mxu0 0.0
        %310 = vmatpush1.msra.mxu0 0.0
        %311 = vmatprep.subr.mxu0 0.0
        %312 = vmatpush1.msra.mxu0 0.0
        %313 = vmatprep.subr.mxu0 0.0
        %314 = vmatpush1.msra.mxu0 0.0
        %315 = vmatprep.subr.mxu0 0.0
        %316 = vmatpush1.msra.mxu0 0.0
        %317 = vmatprep.subr.mxu0 0.0
        %318 = vmatpush1.msra.mxu0 0.0
        %319 = vmatprep.subr.mxu0 0.0
        %320 = vmatpush1.msra.mxu0 0.0
        %321 = vmatprep.subr.mxu0 0.0
        %322 = vmatpush1.msra.mxu0 0.0
        %323 = vmatprep.subr.mxu0 0.0
        %324 = vmatpush1.msra.mxu0 0.0
        %325 = vmatprep.subr.mxu0 0.0
        %326 = vmatpush1.msra.mxu0 %v302
        %327 = vmatprep.subr.mxu0 0.0
        %328 = vmatpush1.msra.mxu0 %v301
        %329 = vmatprep.subr.mxu0 0.0
        %330 = vmatpush1.msra.mxu0 %v300
        %331 = vmatprep.subr.mxu0 0.0
        %332 = vmatpush1.msra.mxu0 %v299
        %333 = vmatprep.subr.mxu0 0.0
        %334 = vmatpush1.msra.mxu0 %v298
        %335 = vmatprep.subr.mxu0 0.0
        %336 = vmatpush1.msra.mxu0 %v297
        %337 = vmatprep.subr.mxu0 0.0
        %338 = vmatpush1.msra.mxu0 %v296
        %339 = vmatprep.subr.mxu0 0.0
        %340 = vmatpush1.msra.mxu0 %v295
        %341 = vmatprep.subr.mxu0 0.0
        %342 = vmatpush2.msra.mxu0 0.0
        %343 = vmatprep.subr.mxu0 0.0
        %344 = vmatpush2.msra.mxu0 0.0
        %345 = vmatprep.subr.mxu0 0.0
        %346 = vmatpush2.msra.mxu0 0.0
        %347 = vmatprep.subr.mxu0 0.0
        %348 = vmatpush2.msra.mxu0 0.0
        %349 = vmatprep.subr.mxu0 0.0
        %350 = vmatpush2.msra.mxu0 0.0
        %351 = vmatprep.subr.mxu0 0.0
        %352 = vmatpush2.msra.mxu0 0.0
        %353 = vmatprep.subr.mxu0 0.0
        %354 = vmatpush2.msra.mxu0 0.0
        %355 = vmatprep.subr.mxu0 0.0
        %356 = vmatpush2.msra.mxu0 0.0
        %357 = vmatprep.subr.mxu0 0.0
        %358 = vmatpush2.msra.mxu0 0.0
        %359 = vmatprep.subr.mxu0 0.0
        %360 = vmatpush2.msra.mxu0 0.0
        %361 = vmatprep.subr.mxu0 0.0
        %362 = vmatpush2.msra.mxu0 0.0
        %363 = vmatprep.subr.mxu0 0.0
        %364 = vmatpush2.msra.mxu0 0.0
        %365 = vmatprep.subr.mxu0 0.0
        %366 = vmatpush2.msra.mxu0 0.0
        %367 = vmatprep.subr.mxu0 0.0
        %368 = vmatpush2.msra.mxu0 0.0
        %369 = vmatprep.subr.mxu0 0.0
        %370 = vmatpush2.msra.mxu0 0.0
        %371 = vmatprep.subr.mxu0 0.0
        %372 = vmatpush2.msra.mxu0 0.0
        %373 = vmatprep.mubr.f32.mxu0 0.0
        %374 = vmatmul.mubr.f32.gmra.mxu0 %v304
        %v375 = vpop.f32.mrf.mxu0
        %v376 = vadd.f32 0.0, %v375
        %v377 = vpop.f32.mrf.mxu0
        %378 = vmatprep.mubr.f32.mxu0 0.0
        %379 = vmatmul.mubr.f32.gmra.mxu0 %v307
        %v380 = vpop.f32.mrf.mxu0
        %v381 = vadd.f32 0.0, %v380
        %v382 = vpop.f32.mrf.mxu0
        %383 = vdwg.mxu0
        %v385 = vsel %vm279, %v282, 0
        %v388 = vsel %vm279, %v283, 0
        %390 = vmatprep.subr.mxu0 0.0
        %391 = vmatpush1.msra.mxu0 0.0
        %392 = vmatprep.subr.mxu0 0.0
        %393 = vmatpush1.msra.mxu0 0.0
        %394 = vmatprep.subr.mxu0 0.0
        %395 = vmatpush1.msra.mxu0 0.0
        %396 = vmatprep.subr.mxu0 0.0
        %397 = vmatpush1.msra.mxu0 0.0
        %398 = vmatprep.subr.mxu0 0.0
        %399 = vmatpush1.msra.mxu0 0.0
        %400 = vmatprep.subr.mxu0 0.0
        %401 = vmatpush1.msra.mxu0 0.0
        %402 = vmatprep.subr.mxu0 0.0
        %403 = vmatpush1.msra.mxu0 0.0
        %404 = vmatprep.subr.mxu0 0.0
        %405 = vmatpush1.msra.mxu0 0.0
        %406 = vmatprep.subr.mxu0 0.0
        %407 = vmatpush1.msra.mxu0 %v291
        %408 = vmatprep.subr.mxu0 0.0
        %409 = vmatpush1.msra.mxu0 %v290
        %410 = vmatprep.subr.mxu0 0.0
        %411 = vmatpush1.msra.mxu0 %v289
        %412 = vmatprep.subr.mxu0 0.0
        %413 = vmatpush1.msra.mxu0 %v288
        %414 = vmatprep.subr.mxu0 0.0
        %415 = vmatpush1.msra.mxu0 %v287
        %416 = vmatprep.subr.mxu0 0.0
        %417 = vmatpush1.msra.mxu0 %v286
        %418 = vmatprep.subr.mxu0 0.0
        %419 = vmatpush1.msra.mxu0 %v285
        %420 = vmatprep.subr.mxu0 0.0
        %421 = vmatpush1.msra.mxu0 %v284
        %422 = vmatprep.subr.mxu0 0.0
        %423 = vmatpush2.msra.mxu0 0.0
        %424 = vmatprep.subr.mxu0 0.0
        %425 = vmatpush2.msra.mxu0 0.0
        %426 = vmatprep.subr.mxu0 0.0
        %427 = vmatpush2.msra.mxu0 0.0
        %428 = vmatprep.subr.mxu0 0.0
        %429 = vmatpush2.msra.mxu0 0.0
        %430 = vmatprep.subr.mxu0 0.0
        %431 = vmatpush2.msra.mxu0 0.0
        %432 = vmatprep.subr.mxu0 0.0
        %433 = vmatpush2.msra.mxu0 0.0
        %434 = vmatprep.subr.mxu0 0.0
        %435 = vmatpush2.msra.mxu0 0.0
        %436 = vmatprep.subr.mxu0 0.0
        %437 = vmatpush2.msra.mxu0 0.0
        %438 = vmatprep.subr.mxu0 0.0
        %439 = vmatpush2.msra.mxu0 0.0
        %440 = vmatprep.subr.mxu0 0.0
        %441 = vmatpush2.msra.mxu0 0.0
        %442 = vmatprep.subr.mxu0 0.0
        %443 = vmatpush2.msra.mxu0 0.0
        %444 = vmatprep.subr.mxu0 0.0
        %445 = vmatpush2.msra.mxu0 0.0
        %446 = vmatprep.subr.mxu0 0.0
        %447 = vmatpush2.msra.mxu0 0.0
        %448 = vmatprep.subr.mxu0 0.0
        %449 = vmatpush2.msra.mxu0 0.0
        %450 = vmatprep.subr.mxu0 0.0
        %451 = vmatpush2.msra.mxu0 0.0
        %452 = vmatprep.subr.mxu0 0.0
        %453 = vmatpush2.msra.mxu0 0.0
        %454 = vmatprep.mubr.f32.mxu0 0.0
        %455 = vmatmul.mubr.f32.gmra.mxu0 %v385
        %v456 = vpop.f32.mrf.mxu0
        %v457 = vadd.f32 %v376, %v456
        %v458 = vpop.f32.mrf.mxu0
        %459 = vmatprep.mubr.f32.mxu0 0.0
        %460 = vmatmul.mubr.f32.gmra.mxu0 %v388
        %v461 = vpop.f32.mrf.mxu0
        %v462 = vadd.f32 %v381, %v461
        %v463 = vpop.f32.mrf.mxu0
        %464 = vdwg.mxu0
        %v465 = vld [vmem:[#allocation2 + $0x2] sm:$0xff]
        %v466 = vld [vmem:[#allocation2 + $0xa] sm:$0xff]
        %s467 = scalar_lea.vmem [#allocation7], 128
        %v468 = vld [vmem:[%s467] sm:$0xff]
        %v469 = vld [vmem:[%s467 + $0x8] sm:$0xff]
        %v470 = vld [vmem:[%s467 + $0x10] sm:$0xff]
        %v471 = vld [vmem:[%s467 + $0x18] sm:$0xff]
        %v472 = vld [vmem:[%s467 + $0x20] sm:$0xff]
        %v473 = vld [vmem:[%s467 + $0x28] sm:$0xff]
        %v474 = vld [vmem:[%s467 + $0x30] sm:$0xff]
        %v475 = vld [vmem:[%s467 + $0x38] sm:$0xff]
        %v477 = vsel %vm279, %v465, 0
        %v480 = vsel %vm279, %v466, 0
        %482 = vmatprep.subr.mxu0 0.0
        %483 = vmatpush1.msra.mxu0 0.0
        %484 = vmatprep.subr.mxu0 0.0
        %485 = vmatpush1.msra.mxu0 0.0
        %486 = vmatprep.subr.mxu0 0.0
        %487 = vmatpush1.msra.mxu0 0.0
        %488 = vmatprep.subr.mxu0 0.0
        %489 = vmatpush1.msra.mxu0 0.0
        %490 = vmatprep.subr.mxu0 0.0
        %491 = vmatpush1.msra.mxu0 0.0
        %492 = vmatprep.subr.mxu0 0.0
        %493 = vmatpush1.msra.mxu0 0.0
        %494 = vmatprep.subr.mxu0 0.0
        %495 = vmatpush1.msra.mxu0 0.0
        %496 = vmatprep.subr.mxu0 0.0
        %497 = vmatpush1.msra.mxu0 0.0
        %498 = vmatprep.subr.mxu0 0.0
        %499 = vmatpush1.msra.mxu0 %v475
        %500 = vmatprep.subr.mxu0 0.0
        %501 = vmatpush1.msra.mxu0 %v474
        %502 = vmatprep.subr.mxu0 0.0
        %503 = vmatpush1.msra.mxu0 %v473
        %504 = vmatprep.subr.mxu0 0.0
        %505 = vmatpush1.msra.mxu0 %v472
        %506 = vmatprep.subr.mxu0 0.0
        %507 = vmatpush1.msra.mxu0 %v471
        %508 = vmatprep.subr.mxu0 0.0
        %509 = vmatpush1.msra.mxu0 %v470
        %510 = vmatprep.subr.mxu0 0.0
        %511 = vmatpush1.msra.mxu0 %v469
        %512 = vmatprep.subr.mxu0 0.0
        %513 = vmatpush1.msra.mxu0 %v468
        %514 = vmatprep.subr.mxu0 0.0
        %515 = vmatpush2.msra.mxu0 0.0
        %516 = vmatprep.subr.mxu0 0.0
        %517 = vmatpush2.msra.mxu0 0.0
        %518 = vmatprep.subr.mxu0 0.0
        %519 = vmatpush2.msra.mxu0 0.0
        %520 = vmatprep.subr.mxu0 0.0
        %521 = vmatpush2.msra.mxu0 0.0
        %522 = vmatprep.subr.mxu0 0.0
        %523 = vmatpush2.msra.mxu0 0.0
        %524 = vmatprep.subr.mxu0 0.0
        %525 = vmatpush2.msra.mxu0 0.0
        %526 = vmatprep.subr.mxu0 0.0
        %527 = vmatpush2.msra.mxu0 0.0
        %528 = vmatprep.subr.mxu0 0.0
        %529 = vmatpush2.msra.mxu0 0.0
        %530 = vmatprep.subr.mxu0 0.0
        %531 = vmatpush2.msra.mxu0 0.0
        %532 = vmatprep.subr.mxu0 0.0
        %533 = vmatpush2.msra.mxu0 0.0
        %534 = vmatprep.subr.mxu0 0.0
        %535 = vmatpush2.msra.mxu0 0.0
        %536 = vmatprep.subr.mxu0 0.0
        %537 = vmatpush2.msra.mxu0 0.0
        %538 = vmatprep.subr.mxu0 0.0
        %539 = vmatpush2.msra.mxu0 0.0
        %540 = vmatprep.subr.mxu0 0.0
        %541 = vmatpush2.msra.mxu0 0.0
        %542 = vmatprep.subr.mxu0 0.0
        %543 = vmatpush2.msra.mxu0 0.0
        %544 = vmatprep.subr.mxu0 0.0
        %545 = vmatpush2.msra.mxu0 0.0
        %546 = vmatprep.mubr.f32.mxu0 0.0
        %547 = vmatmul.mubr.f32.gmra.mxu0 %v477
        %v548 = vpop.f32.mrf.mxu0
        %v549 = vadd.f32 0.0, %v548
        %v550 = vpop.f32.mrf.mxu0
        %551 = vmatprep.mubr.f32.mxu0 0.0
        %552 = vmatmul.mubr.f32.gmra.mxu0 %v480
        %v553 = vpop.f32.mrf.mxu0
        %v554 = vadd.f32 0.0, %v553
        %v555 = vpop.f32.mrf.mxu0
        %556 = vdwg.mxu0
        %v557 = vadd.f32 %v457, %v549
        %v558 = vadd.f32 %v462, %v554
        %v559 = vld [vmem:[%s2] sm:$0x1]
        %v561 = vlaneseq
        %v562 = vshrl.u32 %v561, 7
        %v563 = vsub.s32 0, %v562
        %v564 = vrot.slane %v559, %v563
        %v566 = vadd.f32 %v557, %v564
        %v567 = vadd.f32 %v558, %v564
        %v568 = vmax.f32 %v566, 0.0
        %v569 = vmax.f32 %v567, 0.0
        %570 = vst.msk [vmem:[#allocation3 + $0x1] sm:$0xff] %vm279, %v568
        %571 = vst.msk [vmem:[#allocation3 + $0x9] sm:$0xff] %vm279, %v569
        %v572 = vld [vmem:[#allocation3] sm:$0xff]
        %v573 = vld [vmem:[#allocation3 + $0x8] sm:$0xff]
        %v574 = vld [vmem:[#allocation9] sm:$0xff]
        %v575 = vld [vmem:[#allocation9 + $0x8] sm:$0xff]
        %v576 = vld [vmem:[#allocation9 + $0x10] sm:$0xff]
        %v577 = vld [vmem:[#allocation9 + $0x18] sm:$0xff]
        %v578 = vld [vmem:[#allocation9 + $0x20] sm:$0xff]
        %v579 = vld [vmem:[#allocation9 + $0x28] sm:$0xff]
        %v580 = vld [vmem:[#allocation9 + $0x30] sm:$0xff]
        %v581 = vld [vmem:[#allocation9 + $0x38] sm:$0xff]
        %v582 = vld [vmem:[#allocation3 + $0x1] sm:$0xff]
        %v583 = vld [vmem:[#allocation3 + $0x9] sm:$0xff]
        %s584 = scalar_lea.vmem [#allocation9], 64
        %v585 = vld [vmem:[%s584] sm:$0xff]
        %v586 = vld [vmem:[%s584 + $0x8] sm:$0xff]
        %v587 = vld [vmem:[%s584 + $0x10] sm:$0xff]
        %v588 = vld [vmem:[%s584 + $0x18] sm:$0xff]
        %v589 = vld [vmem:[%s584 + $0x20] sm:$0xff]
        %v590 = vld [vmem:[%s584 + $0x28] sm:$0xff]
        %v591 = vld [vmem:[%s584 + $0x30] sm:$0xff]
        %v592 = vld [vmem:[%s584 + $0x38] sm:$0xff]
        %v594 = vsel %vm279, %v582, 0
        %v597 = vsel %vm279, %v583, 0
        %599 = vmatprep.subr.mxu0 0.0
        %600 = vmatpush1.msra.mxu0 0.0
        %601 = vmatprep.subr.mxu0 0.0
        %602 = vmatpush1.msra.mxu0 0.0
        %603 = vmatprep.subr.mxu0 0.0
        %604 = vmatpush1.msra.mxu0 0.0
        %605 = vmatprep.subr.mxu0 0.0
        %606 = vmatpush1.msra.mxu0 0.0
        %607 = vmatprep.subr.mxu0 0.0
        %608 = vmatpush1.msra.mxu0 0.0
        %609 = vmatprep.subr.mxu0 0.0
        %610 = vmatpush1.msra.mxu0 0.0
        %611 = vmatprep.subr.mxu0 0.0
        %612 = vmatpush1.msra.mxu0 0.0
        %613 = vmatprep.subr.mxu0 0.0
        %614 = vmatpush1.msra.mxu0 0.0
        %615 = vmatprep.subr.mxu0 0.0
        %616 = vmatpush1.msra.mxu0 %v592
        %617 = vmatprep.subr.mxu0 0.0
        %618 = vmatpush1.msra.mxu0 %v591
        %619 = vmatprep.subr.mxu0 0.0
        %620 = vmatpush1.msra.mxu0 %v590
        %621 = vmatprep.subr.mxu0 0.0
        %622 = vmatpush1.msra.mxu0 %v589
        %623 = vmatprep.subr.mxu0 0.0
        %624 = vmatpush1.msra.mxu0 %v588
        %625 = vmatprep.subr.mxu0 0.0
        %626 = vmatpush1.msra.mxu0 %v587
        %627 = vmatprep.subr.mxu0 0.0
        %628 = vmatpush1.msra.mxu0 %v586
        %629 = vmatprep.subr.mxu0 0.0
        %630 = vmatpush1.msra.mxu0 %v585
        %631 = vmatprep.subr.mxu0 0.0
        %632 = vmatpush2.msra.mxu0 0.0
        %633 = vmatprep.subr.mxu0 0.0
        %634 = vmatpush2.msra.mxu0 0.0
        %635 = vmatprep.subr.mxu0 0.0
        %636 = vmatpush2.msra.mxu0 0.0
        %637 = vmatprep.subr.mxu0 0.0
        %638 = vmatpush2.msra.mxu0 0.0
        %639 = vmatprep.subr.mxu0 0.0
        %640 = vmatpush2.msra.mxu0 0.0
        %641 = vmatprep.subr.mxu0 0.0
        %642 = vmatpush2.msra.mxu0 0.0
        %643 = vmatprep.subr.mxu0 0.0
        %644 = vmatpush2.msra.mxu0 0.0
        %645 = vmatprep.subr.mxu0 0.0
        %646 = vmatpush2.msra.mxu0 0.0
        %647 = vmatprep.subr.mxu0 0.0
        %648 = vmatpush2.msra.mxu0 0.0
        %649 = vmatprep.subr.mxu0 0.0
        %650 = vmatpush2.msra.mxu0 0.0
        %651 = vmatprep.subr.mxu0 0.0
        %652 = vmatpush2.msra.mxu0 0.0
        %653 = vmatprep.subr.mxu0 0.0
        %654 = vmatpush2.msra.mxu0 0.0
        %655 = vmatprep.subr.mxu0 0.0
        %656 = vmatpush2.msra.mxu0 0.0
        %657 = vmatprep.subr.mxu0 0.0
        %658 = vmatpush2.msra.mxu0 0.0
        %659 = vmatprep.subr.mxu0 0.0
        %660 = vmatpush2.msra.mxu0 0.0
        %661 = vmatprep.subr.mxu0 0.0
        %662 = vmatpush2.msra.mxu0 0.0
        %663 = vmatprep.mubr.f32.mxu0 0.0
        %664 = vmatmul.mubr.f32.gmra.mxu0 %v594
        %v665 = vpop.f32.mrf.mxu0
        %v666 = vadd.f32 0.0, %v665
        %v667 = vpop.f32.mrf.mxu0
        %668 = vmatprep.mubr.f32.mxu0 0.0
        %669 = vmatmul.mubr.f32.gmra.mxu0 %v597
        %v670 = vpop.f32.mrf.mxu0
        %v671 = vadd.f32 0.0, %v670
        %v672 = vpop.f32.mrf.mxu0
        %673 = vdwg.mxu0
        %v675 = vsel %vm279, %v572, 0
        %v678 = vsel %vm279, %v573, 0
        %680 = vmatprep.subr.mxu0 0.0
        %681 = vmatpush1.msra.mxu0 0.0
        %682 = vmatprep.subr.mxu0 0.0
        %683 = vmatpush1.msra.mxu0 0.0
        %684 = vmatprep.subr.mxu0 0.0
        %685 = vmatpush1.msra.mxu0 0.0
        %686 = vmatprep.subr.mxu0 0.0
        %687 = vmatpush1.msra.mxu0 0.0
        %688 = vmatprep.subr.mxu0 0.0
        %689 = vmatpush1.msra.mxu0 0.0
        %690 = vmatprep.subr.mxu0 0.0
        %691 = vmatpush1.msra.mxu0 0.0
        %692 = vmatprep.subr.mxu0 0.0
        %693 = vmatpush1.msra.mxu0 0.0
        %694 = vmatprep.subr.mxu0 0.0
        %695 = vmatpush1.msra.mxu0 0.0
        %696 = vmatprep.subr.mxu0 0.0
        %697 = vmatpush1.msra.mxu0 %v581
        %698 = vmatprep.subr.mxu0 0.0
        %699 = vmatpush1.msra.mxu0 %v580
        %700 = vmatprep.subr.mxu0 0.0
        %701 = vmatpush1.msra.mxu0 %v579
        %702 = vmatprep.subr.mxu0 0.0
        %703 = vmatpush1.msra.mxu0 %v578
        %704 = vmatprep.subr.mxu0 0.0
        %705 = vmatpush1.msra.mxu0 %v577
        %706 = vmatprep.subr.mxu0 0.0
        %707 = vmatpush1.msra.mxu0 %v576
        %708 = vmatprep.subr.mxu0 0.0
        %709 = vmatpush1.msra.mxu0 %v575
        %710 = vmatprep.subr.mxu0 0.0
        %711 = vmatpush1.msra.mxu0 %v574
        %712 = vmatprep.subr.mxu0 0.0
        %713 = vmatpush2.msra.mxu0 0.0
        %714 = vmatprep.subr.mxu0 0.0
        %715 = vmatpush2.msra.mxu0 0.0
        %716 = vmatprep.subr.mxu0 0.0
        %717 = vmatpush2.msra.mxu0 0.0
        %718 = vmatprep.subr.mxu0 0.0
        %719 = vmatpush2.msra.mxu0 0.0
        %720 = vmatprep.subr.mxu0 0.0
        %721 = vmatpush2.msra.mxu0 0.0
        %722 = vmatprep.subr.mxu0 0.0
        %723 = vmatpush2.msra.mxu0 0.0
        %724 = vmatprep.subr.mxu0 0.0
        %725 = vmatpush2.msra.mxu0 0.0
        %726 = vmatprep.subr.mxu0 0.0
        %727 = vmatpush2.msra.mxu0 0.0
        %728 = vmatprep.subr.mxu0 0.0
        %729 = vmatpush2.msra.mxu0 0.0
        %730 = vmatprep.subr.mxu0 0.0
        %731 = vmatpush2.msra.mxu0 0.0
        %732 = vmatprep.subr.mxu0 0.0
        %733 = vmatpush2.msra.mxu0 0.0
        %734 = vmatprep.subr.mxu0 0.0
        %735 = vmatpush2.msra.mxu0 0.0
        %736 = vmatprep.subr.mxu0 0.0
        %737 = vmatpush2.msra.mxu0 0.0
        %738 = vmatprep.subr.mxu0 0.0
        %739 = vmatpush2.msra.mxu0 0.0
        %740 = vmatprep.subr.mxu0 0.0
        %741 = vmatpush2.msra.mxu0 0.0
        %742 = vmatprep.subr.mxu0 0.0
        %743 = vmatpush2.msra.mxu0 0.0
        %744 = vmatprep.mubr.f32.mxu0 0.0
        %745 = vmatmul.mubr.f32.gmra.mxu0 %v675
        %v746 = vpop.f32.mrf.mxu0
        %v747 = vadd.f32 %v666, %v746
        %v748 = vpop.f32.mrf.mxu0
        %749 = vmatprep.mubr.f32.mxu0 0.0
        %750 = vmatmul.mubr.f32.gmra.mxu0 %v678
        %v751 = vpop.f32.mrf.mxu0
        %v752 = vadd.f32 %v671, %v751
        %v753 = vpop.f32.mrf.mxu0
        %754 = vdwg.mxu0
        %v755 = vld [vmem:[#allocation3 + $0x2] sm:$0xff]
        %v756 = vld [vmem:[#allocation3 + $0xa] sm:$0xff]
        %s757 = scalar_lea.vmem [#allocation9], 128
        %v758 = vld [vmem:[%s757] sm:$0xff]
        %v759 = vld [vmem:[%s757 + $0x8] sm:$0xff]
        %v760 = vld [vmem:[%s757 + $0x10] sm:$0xff]
        %v761 = vld [vmem:[%s757 + $0x18] sm:$0xff]
        %v762 = vld [vmem:[%s757 + $0x20] sm:$0xff]
        %v763 = vld [vmem:[%s757 + $0x28] sm:$0xff]
        %v764 = vld [vmem:[%s757 + $0x30] sm:$0xff]
        %v765 = vld [vmem:[%s757 + $0x38] sm:$0xff]
        %v767 = vsel %vm279, %v755, 0
        %v770 = vsel %vm279, %v756, 0
        %772 = vmatprep.subr.mxu0 0.0
        %773 = vmatpush1.msra.mxu0 0.0
        %774 = vmatprep.subr.mxu0 0.0
        %775 = vmatpush1.msra.mxu0 0.0
        %776 = vmatprep.subr.mxu0 0.0
        %777 = vmatpush1.msra.mxu0 0.0
        %778 = vmatprep.subr.mxu0 0.0
        %779 = vmatpush1.msra.mxu0 0.0
        %780 = vmatprep.subr.mxu0 0.0
        %781 = vmatpush1.msra.mxu0 0.0
        %782 = vmatprep.subr.mxu0 0.0
        %783 = vmatpush1.msra.mxu0 0.0
        %784 = vmatprep.subr.mxu0 0.0
        %785 = vmatpush1.msra.mxu0 0.0
        %786 = vmatprep.subr.mxu0 0.0
        %787 = vmatpush1.msra.mxu0 0.0
        %788 = vmatprep.subr.mxu0 0.0
        %789 = vmatpush1.msra.mxu0 %v765
        %790 = vmatprep.subr.mxu0 0.0
        %791 = vmatpush1.msra.mxu0 %v764
        %792 = vmatprep.subr.mxu0 0.0
        %793 = vmatpush1.msra.mxu0 %v763
        %794 = vmatprep.subr.mxu0 0.0
        %795 = vmatpush1.msra.mxu0 %v762
        %796 = vmatprep.subr.mxu0 0.0
        %797 = vmatpush1.msra.mxu0 %v761
        %798 = vmatprep.subr.mxu0 0.0
        %799 = vmatpush1.msra.mxu0 %v760
        %800 = vmatprep.subr.mxu0 0.0
        %801 = vmatpush1.msra.mxu0 %v759
        %802 = vmatprep.subr.mxu0 0.0
        %803 = vmatpush1.msra.mxu0 %v758
        %804 = vmatprep.subr.mxu0 0.0
        %805 = vmatpush2.msra.mxu0 0.0
        %806 = vmatprep.subr.mxu0 0.0
        %807 = vmatpush2.msra.mxu0 0.0
        %808 = vmatprep.subr.mxu0 0.0
        %809 = vmatpush2.msra.mxu0 0.0
        %810 = vmatprep.subr.mxu0 0.0
        %811 = vmatpush2.msra.mxu0 0.0
        %812 = vmatprep.subr.mxu0 0.0
        %813 = vmatpush2.msra.mxu0 0.0
        %814 = vmatprep.subr.mxu0 0.0
        %815 = vmatpush2.msra.mxu0 0.0
        %816 = vmatprep.subr.mxu0 0.0
        %817 = vmatpush2.msra.mxu0 0.0
        %818 = vmatprep.subr.mxu0 0.0
        %819 = vmatpush2.msra.mxu0 0.0
        %820 = vmatprep.subr.mxu0 0.0
        %821 = vmatpush2.msra.mxu0 0.0
        %822 = vmatprep.subr.mxu0 0.0
        %823 = vmatpush2.msra.mxu0 0.0
        %824 = vmatprep.subr.mxu0 0.0
        %825 = vmatpush2.msra.mxu0 0.0
        %826 = vmatprep.subr.mxu0 0.0
        %827 = vmatpush2.msra.mxu0 0.0
        %828 = vmatprep.subr.mxu0 0.0
        %829 = vmatpush2.msra.mxu0 0.0
        %830 = vmatprep.subr.mxu0 0.0
        %831 = vmatpush2.msra.mxu0 0.0
        %832 = vmatprep.subr.mxu0 0.0
        %833 = vmatpush2.msra.mxu0 0.0
        %834 = vmatprep.subr.mxu0 0.0
        %835 = vmatpush2.msra.mxu0 0.0
        %836 = vmatprep.mubr.f32.mxu0 0.0
        %837 = vmatmul.mubr.f32.gmra.mxu0 %v767
        %v838 = vpop.f32.mrf.mxu0
        %v839 = vadd.f32 0.0, %v838
        %v840 = vpop.f32.mrf.mxu0
        %841 = vmatprep.mubr.f32.mxu0 0.0
        %842 = vmatmul.mubr.f32.gmra.mxu0 %v770
        %v843 = vpop.f32.mrf.mxu0
        %v844 = vadd.f32 0.0, %v843
        %v845 = vpop.f32.mrf.mxu0
        %846 = vdwg.mxu0
        %v847 = vadd.f32 %v747, %v839
        %v848 = vadd.f32 %v752, %v844
        %v849 = vld [vmem:[%s4] sm:$0x1]
        %v851 = vlaneseq
        %v852 = vshrl.u32 %v851, 7
        %v853 = vsub.s32 0, %v852
        %v854 = vrot.slane %v849, %v853
        %v856 = vadd.f32 %v847, %v854
        %v857 = vadd.f32 %v848, %v854
        %v858 = vadd.f32 %v856, %v277
        %v859 = vadd.f32 %v857, %v278
        %v860 = vmax.f32 %v858, 0.0
        %v861 = vmax.f32 %v859, 0.0
        %862 = vst.msk [vmem:[%s271] sm:$0xff] %vm279, %v860
        %863 = vst.msk [vmem:[%s271 + $0x8] sm:$0xff] %vm279, %v861
        %s864 = sand.u32 %s141, 1
        %s865 = scalar_lea.sflag [#allocation6], %s864
        %s866 = sand.u32 %s141, 1
        %s867 = smul.addr %s866, 16
        %s868 = scalar_lea.vmem [#allocation10], %s867
        // Predicated region
        $region53: #{tpu_custom_call.1} parent=39 // pred_check
          %p869 = pneg %p151
        $region54: #{tpu_custom_call.1} parent=39 // pred_check_branch
          %871 = sbr.rel (%p869) target = $region56
        $region55: #{tpu_custom_call.1} parent=39 // pred_region
          %s873 = ssub.s32 256, 256
          %874 = vsyncadd %s865, %s873
          %s875 = smul.addr %s23, 2
          %s876 = smul.addr %s875, 128
          %s877 = scalar_lea.hbm %s5, %s876
          %s878 = sshll.u32 %s868, 4
          %s879 = int_to_ptr.vmem [resolvable:$true] %s878
          %884 = dma.vmem_to_hbm [thread:$0]  %s879, 256, %s877, %s865, 128, 128, 8
        $region56: #{tpu_custom_call.1} parent=39 // pred_fallthru
          _
      $region40: #{tpu_custom_call.1} parent=5 // pred_fallthru
        _
      %p885 = scmp.le.s32.totalorder 2, %s18
      // Predicated region
      $region57: #{tpu_custom_call.1} parent=5 // pred_check
        %p886 = pneg %p885
      $region58: #{tpu_custom_call.1} parent=5 // pred_check_branch
        %888 = sbr.rel (%p886) target = $region60
      $region59: #{tpu_custom_call.1} parent=5 // pred_region
        %s889 = ssub.s32 %s18, 2
        // Predicated region
        $region61: #{tpu_custom_call.1} parent=59 // pred_check
          %p890 = pneg %p157
        $region62: #{tpu_custom_call.1} parent=59 // pred_check_branch
          %892 = sbr.rel (%p890) target = $region64
        $region63: #{tpu_custom_call.1} parent=59 // pred_region
          %s893 = sand.u32 %s142, 1
          %s894 = scalar_lea.sflag [#allocation6], %s893
          %s895 = sand.u32 %s142, 1
          %s896 = smul.addr %s895, 16
          %s897 = scalar_lea.vmem [#allocation10], %s896
          %898 = dma.done %s894, 256
        $region64: #{tpu_custom_call.1} parent=59 // pred_fallthru
          _
      $region60: #{tpu_custom_call.1} parent=5 // pred_fallthru
        _
    $region6: #{tpu_custom_call.1} parent=1 // loop_footer
      %s22 = sadd.s32 1, %s18
    $region7: #{tpu_custom_call.1} parent=1 // loop_footer_branch
      %17 = sbr.rel target = $region3
    $region8: #{tpu_custom_call.1} parent=1 // loop_exit
      _
    %899 = vsyncpa [#allocation5], 1
    %s900 = scalar_lea.sflag [#allocation5], 1
    %901 = vsyncpa %s900, 1
    %902 = vsyncpa [#allocation8], 1
    %903 = vsyncpa [#allocation6], 1
    %s904 = scalar_lea.sflag [#allocation6], 1
    %905 = vsyncpa %s904, 1

</llo_original>
